<compile_context>
chip_gen: v7x
topology: tpu7x:2x2x1
jax: 0.10.0
libtpu: 0.0.40
codegen_flags: <defaults>
</compile_context>

<pallas_src>
import jax
import jax.numpy as jnp
from jax.experimental import pallas as pl
from jax.experimental.pallas import tpu as pltpu


def _gcn_kernel(text_ref, adj_ref, weight_ref, bias_ref, out_ref):
    # text_ref  : (Bblk, N, F_in)   VMEM
    # adj_ref   : (Bblk, N, N)      VMEM
    # weight_ref: (F_in, F_out)     VMEM (same block every grid step)
    # bias_ref  : (1, F_out)        VMEM
    # out_ref   : (Bblk*N, F_out)   VMEM (batch-major packed rows)
    adj = adj_ref[...]                                                  # (Bblk, N, N) f32
    text = text_ref[...]                                                # (Bblk, N, F_in)

    # Fold normalization into adj before aggregating:
    #   ((adj / denom) @ text) @ W  ==  (adj @ (text @ W)) / denom
    inv_denom = 1.0 / (jnp.sum(adj, axis=-1, keepdims=True) + 1.0)      # (Bblk, N, 1)
    adj_n = adj * inv_denom                                             # (Bblk, N, N)

    # Aggregate neighbours over the narrow F_in features first (MXU, batched).
    agg = jnp.einsum('bij,bjf->bif', adj_n, text,
                     preferred_element_type=jnp.float32)                # (Bblk, N, F_in)

    # Single 2-D projection matmul over all Bblk*N rows (better MXU utilisation
    # than Bblk tiny batched matmuls), then bias broadcast.
    bblk, n, f_in = agg.shape
    agg2d = agg.reshape(bblk * n, f_in)                                 # layout-trivial (N % 8 == 0)
    out2d = jnp.dot(agg2d, weight_ref[...],
                    preferred_element_type=jnp.float32)                 # (Bblk*N, F_out)
    out_ref[...] = (out2d + bias_ref[...]).astype(out_ref.dtype)


def graph_convolution(text, adj, weight, bias, *, batch_block=8):
    """Pallas GraphConvolution forward.

    text:  (B, N, F_in)  float32
    adj:   (B, N, N)     float32
    weight:(F_in, F_out) float32
    bias:  (F_out,)      float32
    returns (B, N, F_out) float32
    """
    B, N, F_in = text.shape
    F_out = weight.shape[1]
    bias2d = bias.reshape(1, F_out)

    # Process many batch slabs per grid step to amortize per-step overhead.
    bblk = min(B, batch_block)
    grid = (pl.cdiv(B, bblk),)

    grid_spec = pltpu.PrefetchScalarGridSpec(
        num_scalar_prefetch=0,
        grid=grid,
        in_specs=[
            pl.BlockSpec((bblk, N, F_in), lambda b: (b, 0, 0)),
            pl.BlockSpec((bblk, N, N), lambda b: (b, 0, 0)),
            pl.BlockSpec((F_in, F_out), lambda b: (0, 0)),
            pl.BlockSpec((1, F_out), lambda b: (0, 0)),
        ],
        out_specs=pl.BlockSpec((bblk * N, F_out), lambda b: (b, 0)),
    )

    out2d = pl.pallas_call(
        _gcn_kernel,
        out_shape=jax.ShapeDtypeStruct((B * N, F_out), jnp.float32),
        grid_spec=grid_spec,
        compiler_params=pltpu.CompilerParams(
            dimension_semantics=("parallel",)),
        # TODO(synk): for large N/F variants, tile the node dim, add a K-reduction
        # grid axis with a VMEM accumulator, and raise vmem_limit_bytes (v6e) /
        # shrink row tiles for v7x's 64 MiB VMEM.
    )(text, adj, weight, bias2d)

    return out2d.reshape(B, N, F_out)


def reference(text, adj, weight, bias):
    hidden = jnp.matmul(text, weight)
    denom = jnp.sum(adj, axis=2, keepdims=True) + 1.0
    output = jnp.matmul(adj, hidden) / denom
    return output + bias


if __name__ == "__main__":
    # Small shapes consistent with the module's forward
    B, N, F_in, F_out = 2, 8, 16, 32

    key = jax.random.PRNGKey(0)
    k1, k2, k3, k4 = jax.random.split(key, 4)

    text = jax.random.normal(k1, (B, N, F_in), dtype=jnp.float32)
    # adjacency: non-negative, like a (soft) graph adjacency matrix
    adj = jax.random.uniform(k2, (B, N, N), dtype=jnp.float32)

    # Deterministic parameter init (module declares shapes only; synthetic init)
    stdv = 1.0 / (F_out ** 0.5)
    weight = jax.random.uniform(k3, (F_in, F_out), dtype=jnp.float32,
                                minval=-stdv, maxval=stdv)
    bias = jax.random.uniform(k4, (F_out,), dtype=jnp.float32,
                              minval=-stdv, maxval=stdv)

    out = graph_convolution(text, adj, weight, bias)
    out = jax.block_until_ready(out)

    ref = reference(text, adj, weight, bias)
    assert out.shape == (B, N, F_out)
    # Reassociated matmul order differs only by f32 rounding order.
    assert jnp.allclose(out, ref, atol=1e-4, rtol=1e-4), "mismatch vs reference"

    print("KERNEL_OK")
</pallas_src>

<mosaic_0001>
module attributes {stable_mosaic.version = 11 : i64} {
  func.func @_gcn_kernel(%arg0: i32, %arg1: memref<2x8x16xf32, #tpu.memory_space<vmem>>, %arg2: memref<2x8x8xf32, #tpu.memory_space<vmem>>, %arg3: memref<16x32xf32, #tpu.memory_space<vmem>>, %arg4: memref<1x32xf32, #tpu.memory_space<vmem>>, %arg5: memref<16x32xf32, #tpu.memory_space<vmem>>) attributes {dimension_semantics = [#tpu.dimension_semantics<parallel>], iteration_bounds = array<i64: 1>, scalar_prefetch = 0 : i64, scratch_operands = 0 : i64, tpu.core_type = #tpu.core_type<tc>, window_params = [{transform_indices = @transform_0, window_bounds = array<i64: 2, 8, 16>}, {transform_indices = @transform_1, window_bounds = array<i64: 2, 8, 8>}, {pipeline_mode = #tpu.pipeline_mode<synchronous>, transform_indices = @transform_2, window_bounds = array<i64: 16, 32>}, {pipeline_mode = #tpu.pipeline_mode<synchronous>, transform_indices = @transform_3, window_bounds = array<i64: 1, 32>}, {transform_indices = @transform_4, window_bounds = array<i64: 16, 32>}]} {
    %c0 = arith.constant 0 : index
    %c0_0 = arith.constant 0 : index
    %c0_1 = arith.constant 0 : index
    %0 = vector.load %arg2[%c0, %c0_0, %c0_1] : memref<2x8x8xf32, #tpu.memory_space<vmem>>, vector<2x8x8xf32>
    %c0_2 = arith.constant 0 : index
    %c0_3 = arith.constant 0 : index
    %c0_4 = arith.constant 0 : index
    %1 = vector.load %arg1[%c0_2, %c0_3, %c0_4] : memref<2x8x16xf32, #tpu.memory_space<vmem>>, vector<2x8x16xf32>
    %cst = arith.constant dense<0.000000e+00> : vector<2x8xf32>
    %2 = vector.multi_reduction <add>, %0, %cst [2] : vector<2x8x8xf32> to vector<2x8xf32>
    %3 = vector.shape_cast %2 : vector<2x8xf32> to vector<2x8x1xf32>
    %cst_5 = arith.constant 1.000000e+00 : f32
    %4 = vector.broadcast %cst_5 : f32 to vector<2x8x1xf32>
    %5 = arith.addf %3, %4 : vector<2x8x1xf32>
    %cst_6 = arith.constant 1.000000e+00 : f32
    %6 = vector.broadcast %cst_6 : f32 to vector<2x8x1xf32>
    %7 = arith.divf %6, %5 : vector<2x8x1xf32>
    %8 = vector.broadcast %7 : vector<2x8x1xf32> to vector<2x8x8xf32>
    %9 = arith.mulf %0, %8 : vector<2x8x8xf32>
    "tpu.trace_start"() <{level = 10 : i32, message = "bij,bjf->bif"}> : () -> ()
    %cst_7 = arith.constant dense<0.000000e+00> : vector<2x8x16xf32>
    %10 = tpu.matmul %9, %1, %cst_7 {dimension_numbers = #tpu.dot_dimension_numbers<[2], [1], [1], [2], [0, 0, 0, 1, 1, 2], [0], [0]>} : vector<2x8x8xf32>, vector<2x8x16xf32>, vector<2x8x16xf32> -> vector<2x8x16xf32>
    "tpu.trace_stop"() : () -> ()
    %11 = vector.shape_cast %10 : vector<2x8x16xf32> to vector<16x16xf32>
    %c0_8 = arith.constant 0 : index
    %c0_9 = arith.constant 0 : index
    %12 = vector.load %arg3[%c0_8, %c0_9] : memref<16x32xf32, #tpu.memory_space<vmem>>, vector<16x32xf32>
    %cst_10 = arith.constant dense<0.000000e+00> : vector<16x32xf32>
    %13 = tpu.matmul %11, %12, %cst_10 {dimension_numbers = #tpu.dot_dimension_numbers<[1], [0], [0], [1], [0, 0, 1, 1], [], []>} : vector<16x16xf32>, vector<16x32xf32>, vector<16x32xf32> -> vector<16x32xf32>
    %c0_11 = arith.constant 0 : index
    %c0_12 = arith.constant 0 : index
    %14 = vector.load %arg4[%c0_11, %c0_12] : memref<1x32xf32, #tpu.memory_space<vmem>>, vector<1x32xf32>
    %15 = vector.broadcast %14 : vector<1x32xf32> to vector<16x32xf32>
    %16 = arith.addf %13, %15 : vector<16x32xf32>
    %c0_13 = arith.constant 0 : index
    %c0_14 = arith.constant 0 : index
    %17 = vector.load %arg5[%c0_13, %c0_14] : memref<16x32xf32, #tpu.memory_space<vmem>>, vector<16x32xf32>
    tpu.vector_store %arg5[%c0_13, %c0_14], %16 {strides = array<i32>} : memref<16x32xf32, #tpu.memory_space<vmem>>, vector<16x32xf32>,
    return
  }
  func.func @transform_0(%arg0: i32) -> (i32, i32, i32) {
    %c0_i32 = arith.constant 0 : i32
    %c0_i32_0 = arith.constant 0 : i32
    %c0_i32_1 = arith.constant 0 : i32
    return %arg0, %c0_i32, %c0_i32_0 : i32, i32, i32
  }
  func.func @transform_1(%arg0: i32) -> (i32, i32, i32) {
    %c0_i32 = arith.constant 0 : i32
    %c0_i32_0 = arith.constant 0 : i32
    %c0_i32_1 = arith.constant 0 : i32
    return %arg0, %c0_i32, %c0_i32_0 : i32, i32, i32
  }
  func.func @transform_2(%arg0: i32) -> (i32, i32) {
    %c0_i32 = arith.constant 0 : i32
    %c0_i32_0 = arith.constant 0 : i32
    %c0_i32_1 = arith.constant 0 : i32
    return %c0_i32, %c0_i32_0 : i32, i32
  }
  func.func @transform_3(%arg0: i32) -> (i32, i32) {
    %c0_i32 = arith.constant 0 : i32
    %c0_i32_0 = arith.constant 0 : i32
    %c0_i32_1 = arith.constant 0 : i32
    return %c0_i32, %c0_i32_0 : i32, i32
  }
  func.func @transform_4(%arg0: i32) -> (i32, i32) {
    %c0_i32 = arith.constant 0 : i32
    %c0_i32_0 = arith.constant 0 : i32
    return %arg0, %c0_i32 : i32, i32
  }
}

</mosaic_0001>

<llo_original>
// kernel: tpu_custom_call.1
$region0: #{tpu_custom_call.1}
  #allocation0 [shape = 'u32[]', space=smem, size = 0x4, offset = 0x4, fixed_abs, tag = 'smem constant byte address 0x4 - core index']
  #allocation1 [shape = 'u32[144,128]{1,0:T(1,128)}', space=vmem, size = 0x12000, scoped, tag = 'internal scratch']
  %s0 = inlined_call_operand.hbm [shape: f32[2,8,16], index: 0, kind: input, shape index: {}]
  %s1 = inlined_call_operand.hbm [shape: f32[2,8,8], index: 1, kind: input, shape index: {}]
  %s2 = inlined_call_operand.hbm [shape: f32[16,32], index: 2, kind: input, shape index: {}]
  %s3 = inlined_call_operand.vmem [shape: f32[1,32], index: 3, kind: input, shape index: {}]
  %s4 = inlined_call_operand.hbm [shape: f32[16,32], index: 4, kind: output, shape index: {}]
  %s5 = sld [smem:[#allocation0]]
  $region38: #{tpu_custom_call.1} parent=0
    _
  %s7 = ssub.s32 1, %s5
  %s8 = scalar_select 0, %s7, %s5
  $region1: #{tpu_custom_call.1} parent=0
    #allocation2 [shape = 'u8[8192]{0}', space=vmem, size = 0x2000, scoped, tag = 'input window, operand 0, single buffered']
    #allocation3 [shape = 's32[1]{0}', space=sflag, size = 0x4, scoped, tag = 'scoped memory for tpu_custom_call.1']
    #allocation4 [shape = 's32[1]{0}', space=sflag, size = 0x4, scoped, tag = 'scoped memory for tpu_custom_call.1']
    #allocation5 [shape = 'u8[8192]{0}', space=vmem, size = 0x2000, scoped, tag = 'input window, operand 1, single buffered']
    #allocation6 [shape = 's32[1]{0}', space=sflag, size = 0x4, scoped, tag = 'scoped memory for tpu_custom_call.1']
    #allocation7 [shape = 'u8[8192]{0}', space=vmem, size = 0x2000, scoped, tag = 'input window, operand 2, single buffered']
    #allocation8 [shape = 'u8[8192]{0}', space=vmem, size = 0x2000, scoped, tag = 'output window, operand 0, single buffered']
    %9 = vsyncpa [#allocation3], 0
    %10 = vsyncpa [#allocation6], 0
    %11 = vsyncpa [#allocation4], 0
    // Predicated region
    $region2: #{tpu_custom_call.1} parent=1 // pred_check
      _
    $region3: #{tpu_custom_call.1} parent=1 // pred_check_branch
      %13 = sbr.rel (0) target = $region5
    $region4: #{tpu_custom_call.1} parent=1 // pred_region
      %s15 = ssub.s32 256, 256
      %16 = vsyncadd [#allocation3], %s15
      %s17 = sshll.u32 [#allocation2], 4
      %s18 = int_to_ptr.vmem [resolvable:$true] %s17
      %23 = dma.hbm_to_vmem [thread:$0]  %s0, 256, %s18, [#allocation3], 128, 128, 8
    $region5: #{tpu_custom_call.1} parent=1 // pred_fallthru
      _
    // Predicated region
    $region6: #{tpu_custom_call.1} parent=1 // pred_check
      _
    $region7: #{tpu_custom_call.1} parent=1 // pred_check_branch
      %25 = sbr.rel (0) target = $region9
    $region8: #{tpu_custom_call.1} parent=1 // pred_region
      %s27 = ssub.s32 256, 256
      %28 = vsyncadd [#allocation6], %s27
      %s29 = sshll.u32 [#allocation5], 4
      %s30 = int_to_ptr.vmem [resolvable:$true] %s29
      %35 = dma.hbm_to_vmem [thread:$0]  %s1, 256, %s30, [#allocation6], 128, 128, 8
    $region9: #{tpu_custom_call.1} parent=1 // pred_fallthru
      _
    // Predicated region
    $region10: #{tpu_custom_call.1} parent=1 // pred_check
      _
    $region11: #{tpu_custom_call.1} parent=1 // pred_check_branch
      %37 = sbr.rel (0) target = $region13
    $region12: #{tpu_custom_call.1} parent=1 // pred_region
      %s39 = ssub.s32 256, 256
      %40 = vsyncadd [#allocation6], %s39
      %s41 = sshll.u32 [#allocation7], 4
      %s42 = int_to_ptr.vmem [resolvable:$true] %s41
      %47 = dma.hbm_to_vmem [thread:$0]  %s2, 256, %s42, [#allocation6], 128, 128, 8
    $region13: #{tpu_custom_call.1} parent=1 // pred_fallthru
      _
    // Predicated region
    $region14: #{tpu_custom_call.1} parent=1 // pred_check
      _
    $region15: #{tpu_custom_call.1} parent=1 // pred_check_branch
      %49 = sbr.rel (0) target = $region17
    $region16: #{tpu_custom_call.1} parent=1 // pred_region
      _
    $region17: #{tpu_custom_call.1} parent=1 // pred_fallthru
      _
    // Predicated region
    $region18: #{tpu_custom_call.1} parent=1 // pred_check
      _
    $region19: #{tpu_custom_call.1} parent=1 // pred_check_branch
      %51 = sbr.rel (0) target = $region21
    $region20: #{tpu_custom_call.1} parent=1 // pred_region
      %52 = dma.done [#allocation3], 256
    $region21: #{tpu_custom_call.1} parent=1 // pred_fallthru
      _
    // Predicated region
    $region22: #{tpu_custom_call.1} parent=1 // pred_check
      _
    $region23: #{tpu_custom_call.1} parent=1 // pred_check_branch
      %54 = sbr.rel (0) target = $region25
    $region24: #{tpu_custom_call.1} parent=1 // pred_region
      %55 = dma.done [#allocation6], 256
    $region25: #{tpu_custom_call.1} parent=1 // pred_fallthru
      _
    // Predicated region
    $region26: #{tpu_custom_call.1} parent=1 // pred_check
      _
    $region27: #{tpu_custom_call.1} parent=1 // pred_check_branch
      %57 = sbr.rel (0) target = $region29
    $region28: #{tpu_custom_call.1} parent=1 // pred_region
      %58 = dma.done [#allocation6], 256
    $region29: #{tpu_custom_call.1} parent=1 // pred_fallthru
      _
    %v59 = vld [vmem:[#allocation5] sm:$0xff]
    %v60 = vld [vmem:[#allocation5 + $0x8] sm:$0xff]
    %v61 = vld [vmem:[#allocation2] sm:$0xff]
    %v62 = vld [vmem:[#allocation2 + $0x8] sm:$0xff]
    %vm63 = vcmask 64512
    %v64 = vsel %vm63, %v59, 0.0
    %65 = vadd.xlane.f32.xlu0 %v64
    %v66 = vpop.xlane.xlu0 %65
    %v67 = vsel %vm63, %v60, 0.0
    %68 = vadd.xlane.f32.xlu0 %v67
    %v69 = vpop.xlane.xlu0 %68
    %v70 = vadd.f32 %v66, 1.0
    %v71 = vadd.f32 %v69, 1.0
    %v72 = vrcp.pop %v70
    %v73 = vmul.f32 1.0, %v72
    %v74 = vrcp.pop %v71
    %v75 = vmul.f32 1.0, %v74
    %v76 = vmul.f32 %v59, %v73
    %v77 = vmul.f32 %v60, %v75
    %v79 = vsel %vm63, %v76, 0
    %81 = vmatprep.subr.mxu0 0.0
    %82 = vmatpush1.msra.mxu0 %v61
    %83 = vmatprep.subr.mxu0 0.0
    %84 = vmatpush1.msra.mxu0 0.0
    %85 = vmatprep.subr.mxu0 0.0
    %86 = vmatpush1.msra.mxu0 0.0
    %87 = vmatprep.subr.mxu0 0.0
    %88 = vmatpush1.msra.mxu0 0.0
    %89 = vmatprep.subr.mxu0 0.0
    %90 = vmatpush1.msra.mxu0 0.0
    %91 = vmatprep.subr.mxu0 0.0
    %92 = vmatpush1.msra.mxu0 0.0
    %93 = vmatprep.subr.mxu0 0.0
    %94 = vmatpush1.msra.mxu0 0.0
    %95 = vmatprep.subr.mxu0 0.0
    %96 = vmatpush1.msra.mxu0 0.0
    %97 = vmatprep.subr.mxu0 0.0
    %98 = vmatpush1.msra.mxu0 0.0
    %99 = vmatprep.subr.mxu0 0.0
    %100 = vmatpush1.msra.mxu0 0.0
    %101 = vmatprep.subr.mxu0 0.0
    %102 = vmatpush1.msra.mxu0 0.0
    %103 = vmatprep.subr.mxu0 0.0
    %104 = vmatpush1.msra.mxu0 0.0
    %105 = vmatprep.subr.mxu0 0.0
    %106 = vmatpush1.msra.mxu0 0.0
    %107 = vmatprep.subr.mxu0 0.0
    %108 = vmatpush1.msra.mxu0 0.0
    %109 = vmatprep.subr.mxu0 0.0
    %110 = vmatpush1.msra.mxu0 0.0
    %111 = vmatprep.subr.mxu0 0.0
    %112 = vmatpush1.msra.mxu0 0.0
    %113 = vmatprep.subr.mxu0 0.0
    %114 = vmatpush1.msra.mxu0 0.0
    %115 = vmatprep.subr.mxu0 0.0
    %116 = vmatpush1.msra.mxu0 0.0
    %117 = vmatprep.subr.mxu0 0.0
    %118 = vmatpush1.msra.mxu0 0.0
    %119 = vmatprep.subr.mxu0 0.0
    %120 = vmatpush1.msra.mxu0 0.0
    %121 = vmatprep.subr.mxu0 0.0
    %122 = vmatpush1.msra.mxu0 0.0
    %123 = vmatprep.subr.mxu0 0.0
    %124 = vmatpush1.msra.mxu0 0.0
    %125 = vmatprep.subr.mxu0 0.0
    %126 = vmatpush1.msra.mxu0 0.0
    %127 = vmatprep.subr.mxu0 0.0
    %128 = vmatpush1.msra.mxu0 0.0
    %129 = vmatprep.subr.mxu0 0.0
    %130 = vmatpush1.msra.mxu0 0.0
    %131 = vmatprep.subr.mxu0 0.0
    %132 = vmatpush1.msra.mxu0 0.0
    %133 = vmatprep.subr.mxu0 0.0
    %134 = vmatpush1.msra.mxu0 0.0
    %135 = vmatprep.subr.mxu0 0.0
    %136 = vmatpush1.msra.mxu0 0.0
    %137 = vmatprep.subr.mxu0 0.0
    %138 = vmatpush1.msra.mxu0 0.0
    %139 = vmatprep.subr.mxu0 0.0
    %140 = vmatpush1.msra.mxu0 0.0
    %141 = vmatprep.subr.mxu0 0.0
    %142 = vmatpush1.msra.mxu0 0.0
    %143 = vmatprep.subr.mxu0 0.0
    %144 = vmatpush1.msra.mxu0 0.0
    %145 = vmatprep.mubr.f32.mxu0 0.0
    %146 = vmatmul.mubr.f32.gmra.mrb[0].mxu0 %v79
    %v147 = vpop.f32.mrb[0].mxu0
    %v148 = vadd.f32 0.0, %v147
    %v149 = vpop.f32.mrb[0].mxu0
    %150 = vdwg.mxu0
    %v152 = vsel %vm63, %v77, 0
    %154 = vmatprep.subr.mxu0 0.0
    %155 = vmatpush1.msra.mxu0 %v62
    %156 = vmatprep.subr.mxu0 0.0
    %157 = vmatpush1.msra.mxu0 0.0
    %158 = vmatprep.subr.mxu0 0.0
    %159 = vmatpush1.msra.mxu0 0.0
    %160 = vmatprep.subr.mxu0 0.0
    %161 = vmatpush1.msra.mxu0 0.0
    %162 = vmatprep.subr.mxu0 0.0
    %163 = vmatpush1.msra.mxu0 0.0
    %164 = vmatprep.subr.mxu0 0.0
    %165 = vmatpush1.msra.mxu0 0.0
    %166 = vmatprep.subr.mxu0 0.0
    %167 = vmatpush1.msra.mxu0 0.0
    %168 = vmatprep.subr.mxu0 0.0
    %169 = vmatpush1.msra.mxu0 0.0
    %170 = vmatprep.subr.mxu0 0.0
    %171 = vmatpush1.msra.mxu0 0.0
    %172 = vmatprep.subr.mxu0 0.0
    %173 = vmatpush1.msra.mxu0 0.0
    %174 = vmatprep.subr.mxu0 0.0
    %175 = vmatpush1.msra.mxu0 0.0
    %176 = vmatprep.subr.mxu0 0.0
    %177 = vmatpush1.msra.mxu0 0.0
    %178 = vmatprep.subr.mxu0 0.0
    %179 = vmatpush1.msra.mxu0 0.0
    %180 = vmatprep.subr.mxu0 0.0
    %181 = vmatpush1.msra.mxu0 0.0
    %182 = vmatprep.subr.mxu0 0.0
    %183 = vmatpush1.msra.mxu0 0.0
    %184 = vmatprep.subr.mxu0 0.0
    %185 = vmatpush1.msra.mxu0 0.0
    %186 = vmatprep.subr.mxu0 0.0
    %187 = vmatpush1.msra.mxu0 0.0
    %188 = vmatprep.subr.mxu0 0.0
    %189 = vmatpush1.msra.mxu0 0.0
    %190 = vmatprep.subr.mxu0 0.0
    %191 = vmatpush1.msra.mxu0 0.0
    %192 = vmatprep.subr.mxu0 0.0
    %193 = vmatpush1.msra.mxu0 0.0
    %194 = vmatprep.subr.mxu0 0.0
    %195 = vmatpush1.msra.mxu0 0.0
    %196 = vmatprep.subr.mxu0 0.0
    %197 = vmatpush1.msra.mxu0 0.0
    %198 = vmatprep.subr.mxu0 0.0
    %199 = vmatpush1.msra.mxu0 0.0
    %200 = vmatprep.subr.mxu0 0.0
    %201 = vmatpush1.msra.mxu0 0.0
    %202 = vmatprep.subr.mxu0 0.0
    %203 = vmatpush1.msra.mxu0 0.0
    %204 = vmatprep.subr.mxu0 0.0
    %205 = vmatpush1.msra.mxu0 0.0
    %206 = vmatprep.subr.mxu0 0.0
    %207 = vmatpush1.msra.mxu0 0.0
    %208 = vmatprep.subr.mxu0 0.0
    %209 = vmatpush1.msra.mxu0 0.0
    %210 = vmatprep.subr.mxu0 0.0
    %211 = vmatpush1.msra.mxu0 0.0
    %212 = vmatprep.subr.mxu0 0.0
    %213 = vmatpush1.msra.mxu0 0.0
    %214 = vmatprep.subr.mxu0 0.0
    %215 = vmatpush1.msra.mxu0 0.0
    %216 = vmatprep.subr.mxu0 0.0
    %217 = vmatpush1.msra.mxu0 0.0
    %218 = vmatprep.mubr.f32.mxu0 0.0
    %219 = vmatmul.mubr.f32.gmra.mrb[0].mxu0 %v152
    %v220 = vpop.f32.mrb[0].mxu0
    %v221 = vadd.f32 0.0, %v220
    %v222 = vpop.f32.mrb[0].mxu0
    %223 = vdwg.mxu0
    %v224 = vld [vmem:[#allocation7] sm:$0xff]
    %v225 = vld [vmem:[#allocation7 + $0x8] sm:$0xff]
    %v226 = vld [vmem:[%s3] sm:$0x1]
    %v228 = vlaneseq
    %v229 = vshrl.u32 %v228, 7
    %v230 = vsub.s32 0, %v229
    %v231 = vrot.slane %v226, %v230
    %vm233 = vcmask 130048
    %v235 = vsel %vm233, %v148, 0
    %v238 = vsel %vm233, %v221, 0
    %240 = vmatprep.subr.mxu0 0.0
    %241 = vmatpush1.msra.mxu0 %v224
    %242 = vmatprep.subr.mxu0 0.0
    %243 = vmatpush1.msra.mxu0 %v225
    %244 = vmatprep.subr.mxu0 0.0
    %245 = vmatpush1.msra.mxu0 0.0
    %246 = vmatprep.subr.mxu0 0.0
    %247 = vmatpush1.msra.mxu0 0.0
    %248 = vmatprep.subr.mxu0 0.0
    %249 = vmatpush1.msra.mxu0 0.0
    %250 = vmatprep.subr.mxu0 0.0
    %251 = vmatpush1.msra.mxu0 0.0
    %252 = vmatprep.subr.mxu0 0.0
    %253 = vmatpush1.msra.mxu0 0.0
    %254 = vmatprep.subr.mxu0 0.0
    %255 = vmatpush1.msra.mxu0 0.0
    %256 = vmatprep.subr.mxu0 0.0
    %257 = vmatpush1.msra.mxu0 0.0
    %258 = vmatprep.subr.mxu0 0.0
    %259 = vmatpush1.msra.mxu0 0.0
    %260 = vmatprep.subr.mxu0 0.0
    %261 = vmatpush1.msra.mxu0 0.0
    %262 = vmatprep.subr.mxu0 0.0
    %263 = vmatpush1.msra.mxu0 0.0
    %264 = vmatprep.subr.mxu0 0.0
    %265 = vmatpush1.msra.mxu0 0.0
    %266 = vmatprep.subr.mxu0 0.0
    %267 = vmatpush1.msra.mxu0 0.0
    %268 = vmatprep.subr.mxu0 0.0
    %269 = vmatpush1.msra.mxu0 0.0
    %270 = vmatprep.subr.mxu0 0.0
    %271 = vmatpush1.msra.mxu0 0.0
    %272 = vmatprep.subr.mxu0 0.0
    %273 = vmatpush1.msra.mxu0 0.0
    %274 = vmatprep.subr.mxu0 0.0
    %275 = vmatpush1.msra.mxu0 0.0
    %276 = vmatprep.subr.mxu0 0.0
    %277 = vmatpush1.msra.mxu0 0.0
    %278 = vmatprep.subr.mxu0 0.0
    %279 = vmatpush1.msra.mxu0 0.0
    %280 = vmatprep.subr.mxu0 0.0
    %281 = vmatpush1.msra.mxu0 0.0
    %282 = vmatprep.subr.mxu0 0.0
    %283 = vmatpush1.msra.mxu0 0.0
    %284 = vmatprep.subr.mxu0 0.0
    %285 = vmatpush1.msra.mxu0 0.0
    %286 = vmatprep.subr.mxu0 0.0
    %287 = vmatpush1.msra.mxu0 0.0
    %288 = vmatprep.subr.mxu0 0.0
    %289 = vmatpush1.msra.mxu0 0.0
    %290 = vmatprep.subr.mxu0 0.0
    %291 = vmatpush1.msra.mxu0 0.0
    %292 = vmatprep.subr.mxu0 0.0
    %293 = vmatpush1.msra.mxu0 0.0
    %294 = vmatprep.subr.mxu0 0.0
    %295 = vmatpush1.msra.mxu0 0.0
    %296 = vmatprep.subr.mxu0 0.0
    %297 = vmatpush1.msra.mxu0 0.0
    %298 = vmatprep.subr.mxu0 0.0
    %299 = vmatpush1.msra.mxu0 0.0
    %300 = vmatprep.subr.mxu0 0.0
    %301 = vmatpush1.msra.mxu0 0.0
    %302 = vmatprep.subr.mxu0 0.0
    %303 = vmatpush1.msra.mxu0 0.0
    %304 = vmatprep.mubr.f32.mxu0 0.0
    %305 = vmatmul.mubr.f32.gmra.mrb[0].mxu0 %v235
    %v306 = vpop.f32.mrb[0].mxu0
    %v307 = vadd.f32 %v231, %v306
    %v308 = vpop.f32.mrb[0].mxu0
    %309 = vmatprep.mubr.f32.mxu0 0.0
    %310 = vmatmul.mubr.f32.gmra.mrb[0].mxu0 %v238
    %v311 = vpop.f32.mrb[0].mxu0
    %v312 = vadd.f32 %v231, %v311
    %v313 = vpop.f32.mrb[0].mxu0
    %314 = vdwg.mxu0
    %vm315 = vcmask 261120
    %316 = vst.msk [vmem:[#allocation8] sm:$0xff] %vm315, %v307
    %317 = vst.msk [vmem:[#allocation8 + $0x8] sm:$0xff] %vm315, %v312
    // Predicated region
    $region30: #{tpu_custom_call.1} parent=1 // pred_check
      _
    $region31: #{tpu_custom_call.1} parent=1 // pred_check_branch
      %319 = sbr.rel (0) target = $region33
    $region32: #{tpu_custom_call.1} parent=1 // pred_region
      %s321 = ssub.s32 256, 256
      %322 = vsyncadd [#allocation4], %s321
      %s323 = sshll.u32 [#allocation8], 4
      %s324 = int_to_ptr.vmem [resolvable:$true] %s323
      %329 = dma.vmem_to_hbm [thread:$0]  %s324, 256, %s4, [#allocation4], 128, 128, 8
    $region33: #{tpu_custom_call.1} parent=1 // pred_fallthru
      _
    // Predicated region
    $region34: #{tpu_custom_call.1} parent=1 // pred_check
      _
    $region35: #{tpu_custom_call.1} parent=1 // pred_check_branch
      %331 = sbr.rel (0) target = $region37
    $region36: #{tpu_custom_call.1} parent=1 // pred_region
      %332 = dma.done [#allocation4], 256
    $region37: #{tpu_custom_call.1} parent=1 // pred_fallthru
      _
    %333 = vsyncpa [#allocation3], 1
    %334 = vsyncpa [#allocation6], 1
    %335 = vsyncpa [#allocation4], 1

</llo_original>
